<compile_context>
chip_gen: v7x
topology: tpu7x:2x2x1
jax: 0.10.0
libtpu: 0.0.40
codegen_flags: <defaults>
</compile_context>

<pallas_src>
import math

import numpy as np
import jax
import jax.numpy as jnp
from jax.experimental import pallas as pl
from jax.experimental.pallas import tpu as pltpu


# ----------------------------------------------------------------------------
# PE table construction (mirrors the torch buffer built in __init__).
# Build it once in the activation dtype to avoid a per-call convert.
# ----------------------------------------------------------------------------
def make_pe_table(hidden_size, max_len=1024, dtype=jnp.float32):
    position = np.arange(max_len, dtype=np.float32)[:, None]
    div_term = np.exp(
        np.arange(0, hidden_size, 2, dtype=np.float32) * (-math.log(10000.0) / hidden_size)
    )
    pe = np.zeros((max_len, hidden_size), dtype=np.float32)
    pe[:, 0::2] = np.sin(position * div_term)
    pe[:, 1::2] = np.cos(position * div_term)
    return jnp.asarray(pe, dtype)


# ----------------------------------------------------------------------------
# Kernels (pure VPU elementwise adds; broadcast over batch comes from the
# block shapes, not in-kernel data movement).
# ----------------------------------------------------------------------------
def _add_pe_3d_kernel(x_ref, pe_ref, o_ref):
    # x_ref/o_ref: (tile_b, tile_t, D); pe_ref: (tile_t, D)
    o_ref[...] = x_ref[...] + pe_ref[...][None, :, :]


def _add_pe_flat_kernel(x_ref, pe_ref, o_ref):
    # x_ref/o_ref: (tile_b, tile_f); pe_ref: (1, tile_f)
    o_ref[...] = x_ref[...] + pe_ref[...]


# ----------------------------------------------------------------------------
# Tiling helpers
# ----------------------------------------------------------------------------
def _sublane_step(dtype):
    """Row multiple matching the dtype's sublane packing."""
    bits = jnp.dtype(dtype).itemsize * 8
    if bits >= 32:
        return 8
    if bits == 16:
        return 16
    return 32


def _pick_rows(total, step, row_bytes, budget_bytes):
    """Largest row count (multiple of `step`, or full extent) whose block fits
    the per-block byte budget.  Tiles need NOT divide `total`; the partial
    last block is masked by Pallas."""
    if total <= step or total * row_bytes <= budget_bytes:
        return total
    rows = (budget_bytes // max(1, row_bytes)) // step * step
    return max(step, min(rows, total))


def _largest_divisor_at_most(n, cap):
    cap = max(1, min(n, cap))
    for d in range(cap, 0, -1):
        if n % d == 0:
            return d
    return 1


def _cost(B, T, D, itemsize):
    return pl.CostEstimate(
        flops=B * T * D,
        transcendentals=0,
        bytes_accessed=(2 * B * T * D + T * D) * itemsize,
    )


# ----------------------------------------------------------------------------
# Path A: D on the lane axis (lane-dense when D % 128 == 0; also the correct
# fallback for awkward D where stores are masked).
# ----------------------------------------------------------------------------
def _pe_add_tiled_d(x, pe_table, budget_bytes, donate_x, interpret):
    B, T, D = x.shape
    itemsize = x.dtype.itemsize
    step = _sublane_step(x.dtype)

    tile_t = _pick_rows(T, step, D * itemsize, budget_bytes)
    tile_b = _largest_divisor_at_most(
        B, budget_bytes // max(1, tile_t * D * itemsize))
    n_t = pl.cdiv(T, tile_t)
    n_b = B // tile_b

    x_block = tile_b * tile_t * D * itemsize
    pe_block = tile_t * D * itemsize
    vmem_limit = int(max(32 << 20, 2 * (2 * x_block + pe_block) + (8 << 20)))

    return pl.pallas_call(
        _add_pe_3d_kernel,
        out_shape=jax.ShapeDtypeStruct((B, T, D), x.dtype),
        grid=(n_t, n_b),  # T tiles outer, batch inner -> pe block stays resident
        in_specs=[
            pl.BlockSpec((tile_b, tile_t, D), lambda t, b: (b, t, 0)),
            pl.BlockSpec((tile_t, D), lambda t, b: (t, 0)),
        ],
        out_specs=pl.BlockSpec((tile_b, tile_t, D), lambda t, b: (b, t, 0)),
        compiler_params=pltpu.CompilerParams(
            dimension_semantics=("parallel", "arbitrary"),
            vmem_limit_bytes=vmem_limit,
        ),
        cost_estimate=_cost(B, T, D, itemsize),
        input_output_aliases=({0: 0} if donate_x else {}),
        interpret=interpret,
    )(x, pe_table)


# ----------------------------------------------------------------------------
# Path B: small / non-128-multiple D -> flatten features so the output's last
# dim is a large multiple of 128 (unmasked lane-dense stores).
# ----------------------------------------------------------------------------
def _pe_add_flat(x, pe_table, budget_bytes, donate_x, interpret):
    B, T, D = x.shape
    F = T * D
    itemsize = x.dtype.itemsize
    step = _sublane_step(x.dtype)

    xf = x.reshape(B, F)
    pef = jax.lax.slice_in_dim(pe_table, 0, T, axis=0).reshape(1, F)

    if F * itemsize <= budget_bytes:
        tile_f = F
    else:
        tile_f = max(128, (budget_bytes // itemsize) // 128 * 128)
        tile_f = min(tile_f, F)

    rows_fit = max(1, budget_bytes // (tile_f * itemsize))
    if B <= rows_fit:
        tile_b = B                                   # full extent: always legal
    else:
        tile_b = min(B, max(step, (rows_fit // step) * step))

    n_f = pl.cdiv(F, tile_f)
    n_b = pl.cdiv(B, tile_b)

    x_block = tile_b * tile_f * itemsize
    pe_block = tile_f * itemsize
    vmem_limit = int(max(32 << 20, 2 * (2 * x_block + pe_block) + (8 << 20)))

    out = pl.pallas_call(
        _add_pe_flat_kernel,
        out_shape=jax.ShapeDtypeStruct((B, F), x.dtype),
        grid=(n_f, n_b),  # feature tiles outer, batch inner -> pe tile resident
        in_specs=[
            pl.BlockSpec((tile_b, tile_f), lambda f, b: (b, f)),
            pl.BlockSpec((1, tile_f), lambda f, b: (0, f)),
        ],
        out_specs=pl.BlockSpec((tile_b, tile_f), lambda f, b: (b, f)),
        compiler_params=pltpu.CompilerParams(
            dimension_semantics=("parallel", "arbitrary"),
            vmem_limit_bytes=vmem_limit,
        ),
        cost_estimate=_cost(B, T, D, itemsize),
        input_output_aliases=({0: 0} if donate_x else {}),
        interpret=interpret,
    )(xf, pef)
    return out.reshape(B, T, D)


# ----------------------------------------------------------------------------
# Public wrapper: forward(x) = x + pe[:T]
# ----------------------------------------------------------------------------
def positional_encoding(x, pe_table, *, budget_bytes=4 << 20, donate_x=False,
                        interpret=False):
    """x: (B, T, D); pe_table: (max_len, D). Returns x + pe_table[:T][None]."""
    B, T, D = x.shape
    max_len = pe_table.shape[0]
    assert T <= max_len, f"sequence length {T} exceeds max_len {max_len}"

    if pe_table.dtype != x.dtype:
        # NOTE: if x is bf16 this quantizes the fp32 table before the add
        # (the torch reference adds an fp32 buffer) — tiny numeric deviation.
        # Prefer building the table directly in x.dtype via make_pe_table.
        pe_table = pe_table.astype(x.dtype)

    if D % 128 == 0:
        return _pe_add_tiled_d(x, pe_table, budget_bytes, donate_x, interpret)
    if (T * D) % 128 == 0:
        return _pe_add_flat(x, pe_table, budget_bytes, donate_x, interpret)
    # Awkward D and T*D: keep full-D lane blocks (masked stores) — correct,
    # just not lane-dense.
    return _pe_add_tiled_d(x, pe_table, budget_bytes, donate_x, interpret)


# ----------------------------------------------------------------------------
if __name__ == "__main__":
    MAX_LEN = 1024

    def check(B, T, D, seed):
        x = jax.random.normal(jax.random.PRNGKey(seed), (B, T, D), jnp.float32)
        pe = make_pe_table(D, MAX_LEN, dtype=x.dtype)
        out = jax.block_until_ready(positional_encoding(x, pe))
        ref = x + pe[None, :T, :]
        assert out.shape == (B, T, D)
        assert bool(jnp.all(jnp.isfinite(out))), "non-finite output"
        err = float(jnp.max(jnp.abs(out - ref)))
        assert err <= 1e-6, f"mismatch vs reference (B={B},T={T},D={D}): {err}"

    # small shapes consistent with the module's forward: (batch, seq, hidden)
    # -> exercises the flattened lane-dense path (D=32 not a multiple of 128)
    check(2, 8, 32, seed=0)

    # lane-dense D path, multi-block grid with a masked partial last T tile
    check(2, 520, 2048, seed=1)

    # flattened path with D not a multiple of 128 but T*D % 128 == 0
    check(2, 64, 96, seed=2)

    print("KERNEL_OK")
</pallas_src>

<mosaic_0001>
module attributes {stable_mosaic.version = 11 : i64} {
  func.func @_add_pe_flat_kernel(%arg0: i32, %arg1: i32, %arg2: memref<2x256xf32, #tpu.memory_space<vmem>>, %arg3: memref<1x256xf32, #tpu.memory_space<vmem>>, %arg4: memref<2x256xf32, #tpu.memory_space<vmem>>) attributes {dimension_semantics = [#tpu.dimension_semantics<parallel>, #tpu.dimension_semantics<arbitrary>], iteration_bounds = array<i64: 1, 1>, scalar_prefetch = 0 : i64, scratch_operands = 0 : i64, tpu.core_type = #tpu.core_type<tc>, window_params = [{transform_indices = @transform_0, window_bounds = array<i64: 2, 256>}, {transform_indices = @transform_1, window_bounds = array<i64: 1, 256>}, {transform_indices = @transform_2, window_bounds = array<i64: 2, 256>}]} {
    %c0 = arith.constant 0 : index
    %c0_0 = arith.constant 0 : index
    %0 = vector.load %arg2[%c0, %c0_0] : memref<2x256xf32, #tpu.memory_space<vmem>>, vector<2x256xf32>
    %c0_1 = arith.constant 0 : index
    %c0_2 = arith.constant 0 : index
    %1 = vector.load %arg3[%c0_1, %c0_2] : memref<1x256xf32, #tpu.memory_space<vmem>>, vector<1x256xf32>
    %2 = vector.broadcast %1 : vector<1x256xf32> to vector<2x256xf32>
    %3 = arith.addf %0, %2 : vector<2x256xf32>
    %c0_3 = arith.constant 0 : index
    %c0_4 = arith.constant 0 : index
    %4 = vector.load %arg4[%c0_3, %c0_4] : memref<2x256xf32, #tpu.memory_space<vmem>>, vector<2x256xf32>
    tpu.vector_store %arg4[%c0_3, %c0_4], %3 {strides = array<i32>} : memref<2x256xf32, #tpu.memory_space<vmem>>, vector<2x256xf32>,
    return
  }
  func.func @transform_0(%arg0: i32, %arg1: i32) -> (i32, i32) {
    %c0_i32 = arith.constant 0 : i32
    return %arg1, %arg0 : i32, i32
  }
  func.func @transform_1(%arg0: i32, %arg1: i32) -> (i32, i32) {
    %c0_i32 = arith.constant 0 : i32
    %c0_i32_0 = arith.constant 0 : i32
    return %c0_i32, %arg0 : i32, i32
  }
  func.func @transform_2(%arg0: i32, %arg1: i32) -> (i32, i32) {
    %c0_i32 = arith.constant 0 : i32
    return %arg1, %arg0 : i32, i32
  }
}

</mosaic_0001>

<llo_original>
// kernel: tpu_custom_call.1
$region0: #{tpu_custom_call.1}
  #allocation0 [shape = 'u32[]', space=smem, size = 0x4, offset = 0x4, fixed_abs, tag = 'smem constant byte address 0x4 - core index']
  #allocation1 [shape = 'u32[144,128]{1,0:T(1,128)}', space=vmem, size = 0x12000, scoped, tag = 'internal scratch']
  %s0 = inlined_call_operand.hbm [shape: f32[2,256], index: 0, kind: input, shape index: {}]
  %s1 = inlined_call_operand.vmem [shape: f32[1,256], index: 1, kind: input, shape index: {}]
  %s2 = inlined_call_operand.hbm [shape: f32[2,256], index: 2, kind: output, shape index: {}]
  %s3 = sld [smem:[#allocation0]]
  $region22: #{tpu_custom_call.1} parent=0
    _
  %s5 = ssub.s32 1, %s3
  %s6 = scalar_select 0, %s5, %s3
  $region1: #{tpu_custom_call.1} parent=0
    #allocation2 [shape = 'u8[2048]{0}', space=vmem, size = 0x800, scoped, tag = 'input window, operand 0, single buffered']
    #allocation3 [shape = 's32[1]{0}', space=sflag, size = 0x4, scoped, tag = 'scoped memory for tpu_custom_call.1']
    #allocation4 [shape = 's32[1]{0}', space=sflag, size = 0x4, scoped, tag = 'scoped memory for tpu_custom_call.1']
    #allocation5 [shape = 'u8[2048]{0}', space=vmem, size = 0x800, scoped, tag = 'output window, operand 0, single buffered']
    %7 = vsyncpa [#allocation3], 0
    %8 = vsyncpa [#allocation4], 0
    // Predicated region
    $region2: #{tpu_custom_call.1} parent=1 // pred_check
      _
    $region3: #{tpu_custom_call.1} parent=1 // pred_check_branch
      %10 = sbr.rel (0) target = $region5
    $region4: #{tpu_custom_call.1} parent=1 // pred_region
      %s12 = ssub.s32 64, 64
      %13 = vsyncadd [#allocation3], %s12
      %s15 = sshll.u32 [#allocation2], 4
      %s16 = int_to_ptr.vmem [resolvable:$true] %s15
      %18 = dma.hbm_to_vmem [thread:$0]  %s0, 64, %s16, [#allocation3]
    $region5: #{tpu_custom_call.1} parent=1 // pred_fallthru
      _
    // Predicated region
    $region6: #{tpu_custom_call.1} parent=1 // pred_check
      _
    $region7: #{tpu_custom_call.1} parent=1 // pred_check_branch
      %20 = sbr.rel (0) target = $region9
    $region8: #{tpu_custom_call.1} parent=1 // pred_region
      _
    $region9: #{tpu_custom_call.1} parent=1 // pred_fallthru
      _
    // Predicated region
    $region10: #{tpu_custom_call.1} parent=1 // pred_check
      _
    $region11: #{tpu_custom_call.1} parent=1 // pred_check_branch
      %22 = sbr.rel (0) target = $region13
    $region12: #{tpu_custom_call.1} parent=1 // pred_region
      %23 = dma.done [#allocation3], 64
    $region13: #{tpu_custom_call.1} parent=1 // pred_fallthru
      _
    %v24 = vld [vmem:[#allocation2] sm:$0xf]
    %v25 = vld [vmem:[%s1] sm:$0x3]
    %v27 = vlaneseq
    %v28 = vshrl.u32 %v27, 7
    %v29 = vsub.s32 0, %v28
    %v30 = vrot.slane %v25, %v29
    %v31 = vlaneseq
    %v32 = vshrl.u32 %v31, 7
    %v33 = vsub.s32 1, %v32
    %v34 = vrot.slane %v25, %v33
    %v35 = vcombine.low %v30, %v34
    %v37 = vunpack.c.l.s4 1983009808
    %v38 = vunpack.c.0.s8 %v37
    %v39 = vlaneseq
    %v40 = vshrl.u32 %v39, 7
    %v41 = vsub.s32 %v38, %v40
    %v42 = vrot.slane %v35, %v41
    %v44 = vadd.f32 %v24, %v42
    %45 = vst [vmem:[#allocation5] sm:$0xf] %v44
    // Predicated region
    $region14: #{tpu_custom_call.1} parent=1 // pred_check
      _
    $region15: #{tpu_custom_call.1} parent=1 // pred_check_branch
      %47 = sbr.rel (0) target = $region17
    $region16: #{tpu_custom_call.1} parent=1 // pred_region
      %s49 = ssub.s32 64, 64
      %50 = vsyncadd [#allocation4], %s49
      %s52 = sshll.u32 [#allocation5], 4
      %s53 = int_to_ptr.vmem [resolvable:$true] %s52
      %55 = dma.vmem_to_hbm [thread:$0]  %s53, 64, %s2, [#allocation4]
    $region17: #{tpu_custom_call.1} parent=1 // pred_fallthru
      _
    // Predicated region
    $region18: #{tpu_custom_call.1} parent=1 // pred_check
      _
    $region19: #{tpu_custom_call.1} parent=1 // pred_check_branch
      %57 = sbr.rel (0) target = $region21
    $region20: #{tpu_custom_call.1} parent=1 // pred_region
      %58 = dma.done [#allocation4], 64
    $region21: #{tpu_custom_call.1} parent=1 // pred_fallthru
      _
    %59 = vsyncpa [#allocation3], 1
    %60 = vsyncpa [#allocation4], 1

</llo_original>
